<compile_context>
chip_gen: v5e
topology: v5e:2x2
jax: 0.10.0
libtpu: 0.0.40
codegen_flags: <defaults>
</compile_context>

<pallas_src>
import functools

import jax
import jax.numpy as jnp
from jax.experimental import pallas as pl
from jax.experimental.pallas import tpu as pltpu

LANES = 128        # vreg lane width; hidden dims are zero-padded to this
SUB = 16           # sublane-tile alignment valid for both f32 (8) and bf16 (16)
H1, H2 = 30, 20    # true hidden widths of the PyTorch module


def _round_up(x, m):
    return (x + m - 1) // m * m


def _default_tile_b():
    """Per-chip batch-tile cap (review guidance: 4096 on v6e/v7x, 2048 on v5e)."""
    try:
        kind = jax.devices()[0].device_kind.lower()
    except Exception:
        return 2048
    return 4096 if ("v6" in kind or "v7" in kind) else 2048


def _choose_tile(batch, tile_b):
    """Pick a batch tile: >=2 balanced blocks (feeds both v7x TCs), <= tile_b."""
    if batch <= 8:
        return batch                       # single block equal to full dim is legal
    n_tiles = max(2, pl.cdiv(batch, tile_b))
    if n_tiles % 2:                        # prefer an even tile count for 2 TCs
        n_tiles += 1
    return min(tile_b, _round_up(pl.cdiv(batch, n_tiles), 8))


def mlp_kernel(x_ref, p_ref, o_ref, *, ni_pad, r_w1, r_w2, r_w3):
    """One batch tile: 3 lane-dense matmuls against the resident param slab."""
    w_dtype = p_ref.dtype
    x = x_ref[...].astype(w_dtype)

    b1 = p_ref[0:1, :]                      # (1, 128), zero past col H1-1
    b2 = p_ref[1:2, :]                      # (1, 128), zero past col H2-1
    b3 = p_ref[2:3, :]                      # (1, 128), zero past col num_outputs-1
    w1 = p_ref[r_w1:r_w1 + ni_pad, :]       # (ni_pad, 128) = W1^T zero-padded
    w2 = p_ref[r_w2:r_w2 + LANES, :]        # (128, 128)    = W2^T zero-padded
    w3 = p_ref[r_w3:r_w3 + LANES, :]        # (128, 128)    = W3^T zero-padded

    # Layer 1: Linear + ReLU (padded lanes stay exactly 0: relu(0*x + 0) = 0).
    # Matmuls accumulate in f32; bias-add/ReLU stay f32 (no bf16 VPU on v5e).
    h1 = jnp.dot(x, w1, preferred_element_type=jnp.float32) + b1
    h1 = jnp.maximum(h1, 0.0).astype(w_dtype)
    # Layer 2: Linear + ReLU
    h2 = jnp.dot(h1, w2, preferred_element_type=jnp.float32) + b2
    h2 = jnp.maximum(h2, 0.0).astype(w_dtype)
    # Layer 3: Linear (logits); padded columns are exactly 0.
    logits = jnp.dot(h2, w3, preferred_element_type=jnp.float32) + b3

    # Lane-dense (tile, 128) store; the wrapper slices off the padded columns.
    o_ref[...] = logits.astype(o_ref.dtype)


def pack_params(params, num_inputs, num_outputs, dtype=jnp.bfloat16):
    """One-time packing of PyTorch-convention weights into a single (rows, 128) slab.

    Layout (rows, all zero-padded to 128 lanes, region starts 16-row aligned):
      row 0             : b1      row 1: b2      row 2: b3   (rows 3..15 pad)
      rows r_w1..+ni_pad: W1^T    rows r_w2..+128: W2^T      rows r_w3..+128: W3^T
    Default dtype bf16 halves DMA bytes and gives native-rate MXU passes on
    all gens; the kernel accumulates in f32.  Use dtype=jnp.float32 for exact
    parity with the f32 PyTorch module.
    """
    ni = num_inputs
    assert max(ni, H1, H2, num_outputs) <= LANES, (
        "pack_params assumes every dim fits one 128-lane slab row")
    ni_pad = _round_up(ni, 8)
    r_w1 = SUB
    r_w2 = r_w1 + _round_up(ni_pad, SUB)
    r_w3 = r_w2 + LANES
    rows = r_w3 + LANES

    slab = jnp.zeros((rows, LANES), jnp.float32)
    slab = slab.at[0, :H1].set(params["b1"])
    slab = slab.at[1, :H2].set(params["b2"])
    slab = slab.at[2, :num_outputs].set(params["b3"])
    slab = slab.at[r_w1:r_w1 + ni, :H1].set(params["w1"].T)
    slab = slab.at[r_w2:r_w2 + H1, :H2].set(params["w2"].T)
    slab = slab.at[r_w3:r_w3 + H2, :num_outputs].set(params["w3"].T)
    slab = slab.astype(dtype)

    meta = dict(ni=ni, ni_pad=ni_pad, num_outputs=num_outputs,
                r_w1=r_w1, r_w2=r_w2, r_w3=r_w3, rows=rows)
    return slab, meta


def neural_network_forward(x, packed, meta, *, tile_b=None, out_dtype=jnp.float32):
    """x: (batch, num_inputs); packed/meta from pack_params(). Returns f32 logits."""
    batch, ni = x.shape
    assert ni == meta["ni"]
    ni_pad = meta["ni_pad"]
    if ni != ni_pad:  # keep the W1 slice sublane-aligned for arbitrary ni
        x = jnp.pad(x, ((0, 0), (0, ni_pad - ni)))

    if tile_b is None:
        tile_b = _default_tile_b()
    tile = _choose_tile(batch, tile_b)
    grid = (pl.cdiv(batch, tile),)

    kernel = functools.partial(
        mlp_kernel, ni_pad=ni_pad,
        r_w1=meta["r_w1"], r_w2=meta["r_w2"], r_w3=meta["r_w3"])

    out_padded = pl.pallas_call(
        kernel,
        out_shape=jax.ShapeDtypeStruct((batch, LANES), out_dtype),
        grid_spec=pltpu.PrefetchScalarGridSpec(
            num_scalar_prefetch=0,
            grid=grid,
            in_specs=[
                pl.BlockSpec((tile, ni_pad), lambda i: (i, 0)),             # x tile
                pl.BlockSpec((meta["rows"], LANES), lambda i: (0, 0)),      # params, resident
            ],
            out_specs=pl.BlockSpec((tile, LANES), lambda i: (i, 0)),        # lane-dense store
        ),
        compiler_params=pltpu.CompilerParams(
            dimension_semantics=("parallel",)),   # both TCs on v7x
    )(x, packed)

    return out_padded[:, :meta["num_outputs"]]


def init_params(key, num_inputs, num_outputs):
    """Deterministic init matching the torch.nn.Linear shapes (out, in)."""
    dims = [(H1, num_inputs), (H2, H1), (num_outputs, H2)]
    params = {}
    for i, (fan_out, fan_in) in enumerate(dims, start=1):
        key, kw, kb = jax.random.split(key, 3)
        bound = 1.0 / jnp.sqrt(fan_in)
        params[f"w{i}"] = jax.random.uniform(
            kw, (fan_out, fan_in), jnp.float32, -bound, bound)
        params[f"b{i}"] = jax.random.uniform(
            kb, (fan_out,), jnp.float32, -bound, bound)
    return params


if __name__ == "__main__":
    num_inputs, num_outputs = 32, 8

    key = jax.random.PRNGKey(0)
    key, kp = jax.random.split(key)
    params = init_params(kp, num_inputs, num_outputs)

    def reference(xf):
        h = jnp.maximum(xf @ params["w1"].T + params["b1"], 0.0)
        h = jnp.maximum(h @ params["w2"].T + params["b2"], 0.0)
        return h @ params["w3"].T + params["b3"]

    # --- Check 1: exact-semantics path (f32 operands, tiny batch) ----------
    key, kx = jax.random.split(key)
    x_small = jax.random.normal(kx, (8, num_inputs), jnp.float32)
    packed_f32, meta = pack_params(params, num_inputs, num_outputs,
                                   dtype=jnp.float32)
    out_f32 = jax.block_until_ready(
        neural_network_forward(x_small, packed_f32, meta))
    assert out_f32.shape == (8, num_outputs)
    assert jnp.allclose(out_f32, reference(x_small), atol=1e-5, rtol=1e-5)

    # --- Check 2: recommended fast path (bf16 operands, f32 accumulation,
    #     balanced 2-block grid so both v7x TensorCores get work) ----------
    key, kx2 = jax.random.split(key)
    x_mid = jax.random.normal(kx2, (256, num_inputs), jnp.float32)
    packed_bf16, meta = pack_params(params, num_inputs, num_outputs,
                                    dtype=jnp.bfloat16)
    out_bf16 = jax.block_until_ready(
        neural_network_forward(x_mid.astype(jnp.bfloat16), packed_bf16, meta))
    assert out_bf16.shape == (256, num_outputs)
    assert jnp.allclose(out_bf16, reference(x_mid), atol=2e-2, rtol=2e-2)

    print("KERNEL_OK")
</pallas_src>

<mosaic_0001>
module attributes {stable_mosaic.version = 11 : i64} {
  func.func @mlp_kernel(%arg0: i32, %arg1: memref<8x32xf32, #tpu.memory_space<vmem>>, %arg2: memref<304x128xf32, #tpu.memory_space<vmem>>, %arg3: memref<8x128xf32, #tpu.memory_space<vmem>>) attributes {dimension_semantics = [#tpu.dimension_semantics<parallel>], iteration_bounds = array<i64: 1>, scalar_prefetch = 0 : i64, scratch_operands = 0 : i64, tpu.core_type = #tpu.core_type<tc>, window_params = [{transform_indices = @transform_0, window_bounds = array<i64: 8, 32>}, {pipeline_mode = #tpu.pipeline_mode<synchronous>, transform_indices = @transform_1, window_bounds = array<i64: 304, 128>}, {transform_indices = @transform_2, window_bounds = array<i64: 8, 128>}]} {
    %c0 = arith.constant 0 : index
    %c0_0 = arith.constant 0 : index
    %0 = vector.load %arg1[%c0, %c0_0] : memref<8x32xf32, #tpu.memory_space<vmem>>, vector<8x32xf32>
    %c0_1 = arith.constant 0 : index
    %c0_2 = arith.constant 0 : index
    %1 = vector.load %arg2[%c0_1, %c0_2] : memref<304x128xf32, #tpu.memory_space<vmem>>, vector<1x128xf32>
    %c1 = arith.constant 1 : index
    %c0_3 = arith.constant 0 : index
    %2 = vector.load %arg2[%c1, %c0_3] : memref<304x128xf32, #tpu.memory_space<vmem>>, vector<1x128xf32>
    %c2 = arith.constant 2 : index
    %c0_4 = arith.constant 0 : index
    %3 = vector.load %arg2[%c2, %c0_4] : memref<304x128xf32, #tpu.memory_space<vmem>>, vector<1x128xf32>
    %c16 = arith.constant 16 : index
    %c0_5 = arith.constant 0 : index
    %4 = vector.load %arg2[%c16, %c0_5] : memref<304x128xf32, #tpu.memory_space<vmem>>, vector<32x128xf32>
    %c48 = arith.constant 48 : index
    %c0_6 = arith.constant 0 : index
    %5 = vector.load %arg2[%c48, %c0_6] : memref<304x128xf32, #tpu.memory_space<vmem>>, vector<128x128xf32>
    %c176 = arith.constant 176 : index
    %c0_7 = arith.constant 0 : index
    %6 = vector.load %arg2[%c176, %c0_7] : memref<304x128xf32, #tpu.memory_space<vmem>>, vector<128x128xf32>
    %cst = arith.constant dense<0.000000e+00> : vector<8x128xf32>
    %7 = tpu.matmul %0, %4, %cst {dimension_numbers = #tpu.dot_dimension_numbers<[1], [0], [0], [1], [0, 0, 1, 1], [], []>} : vector<8x32xf32>, vector<32x128xf32>, vector<8x128xf32> -> vector<8x128xf32>
    %8 = vector.broadcast %1 : vector<1x128xf32> to vector<8x128xf32>
    %9 = arith.addf %7, %8 : vector<8x128xf32>
    %cst_8 = arith.constant 0.000000e+00 : f32
    %10 = vector.broadcast %cst_8 : f32 to vector<8x128xf32>
    %11 = arith.maximumf %9, %10 : vector<8x128xf32>
    %cst_9 = arith.constant dense<0.000000e+00> : vector<8x128xf32>
    %12 = tpu.matmul %11, %5, %cst_9 {dimension_numbers = #tpu.dot_dimension_numbers<[1], [0], [0], [1], [0, 0, 1, 1], [], []>} : vector<8x128xf32>, vector<128x128xf32>, vector<8x128xf32> -> vector<8x128xf32>
    %13 = vector.broadcast %2 : vector<1x128xf32> to vector<8x128xf32>
    %14 = arith.addf %12, %13 : vector<8x128xf32>
    %cst_10 = arith.constant 0.000000e+00 : f32
    %15 = vector.broadcast %cst_10 : f32 to vector<8x128xf32>
    %16 = arith.maximumf %14, %15 : vector<8x128xf32>
    %cst_11 = arith.constant dense<0.000000e+00> : vector<8x128xf32>
    %17 = tpu.matmul %16, %6, %cst_11 {dimension_numbers = #tpu.dot_dimension_numbers<[1], [0], [0], [1], [0, 0, 1, 1], [], []>} : vector<8x128xf32>, vector<128x128xf32>, vector<8x128xf32> -> vector<8x128xf32>
    %18 = vector.broadcast %3 : vector<1x128xf32> to vector<8x128xf32>
    %19 = arith.addf %17, %18 : vector<8x128xf32>
    %c0_12 = arith.constant 0 : index
    %c0_13 = arith.constant 0 : index
    %20 = vector.load %arg3[%c0_12, %c0_13] : memref<8x128xf32, #tpu.memory_space<vmem>>, vector<8x128xf32>
    tpu.vector_store %arg3[%c0_12, %c0_13], %19 {strides = array<i32>} : memref<8x128xf32, #tpu.memory_space<vmem>>, vector<8x128xf32>,
    return
  }
  func.func @transform_0(%arg0: i32) -> (i32, i32) {
    %c0_i32 = arith.constant 0 : i32
    %c0_i32_0 = arith.constant 0 : i32
    return %arg0, %c0_i32 : i32, i32
  }
  func.func @transform_1(%arg0: i32) -> (i32, i32) {
    %c0_i32 = arith.constant 0 : i32
    %c0_i32_0 = arith.constant 0 : i32
    %c0_i32_1 = arith.constant 0 : i32
    return %c0_i32, %c0_i32_0 : i32, i32
  }
  func.func @transform_2(%arg0: i32) -> (i32, i32) {
    %c0_i32 = arith.constant 0 : i32
    %c0_i32_0 = arith.constant 0 : i32
    return %arg0, %c0_i32 : i32, i32
  }
}

</mosaic_0001>

<llo_original>
// kernel: tpu_custom_call.1
$region0: #{tpu_custom_call.1}
  #allocation0 [shape = 'u32[]', space=smem, size = 0x4, offset = 0x4, fixed_abs, tag = 'smem constant byte address 0x4 - core index']
  #allocation1 [shape = 'u32[72,128]{1,0:T(1,128)}', space=vmem, size = 0x9000, scoped, tag = 'internal scratch']
  %s0 = inlined_call_operand.hbm [shape: f32[8,32], index: 0, kind: input, shape index: {}]
  %s1 = inlined_call_operand.hbm [shape: f32[304,128], index: 1, kind: input, shape index: {}]
  %s2 = inlined_call_operand.hbm [shape: f32[8,128], index: 2, kind: output, shape index: {}]
  %s3 = sld [smem:[#allocation0]]
  $region26: #{tpu_custom_call.1} parent=0
    _
  %s5 = ssub.s32 1, %s3
  %s6 = scalar_select 0, %s5, %s3
  $region1: #{tpu_custom_call.1} parent=0
    #allocation2 [shape = 'u8[4096]{0}', space=vmem, size = 0x1000, scoped, tag = 'input window, operand 0, single buffered']
    #allocation3 [shape = 's32[1]{0}', space=sflag, size = 0x4, scoped, tag = 'scoped memory for tpu_custom_call.1']
    #allocation4 [shape = 's32[1]{0}', space=sflag, size = 0x4, scoped, tag = 'scoped memory for tpu_custom_call.1']
    #allocation5 [shape = 'u8[155648]{0}', space=vmem, size = 0x26000, scoped, tag = 'input window, operand 1, single buffered']
    #allocation6 [shape = 's32[1]{0}', space=sflag, size = 0x4, scoped, tag = 'scoped memory for tpu_custom_call.1']
    #allocation7 [shape = 'u8[4096]{0}', space=vmem, size = 0x1000, scoped, tag = 'output window, operand 0, single buffered']
    %7 = vsyncpa [#allocation3], 0
    %8 = vsyncpa [#allocation6], 0
    %9 = vsyncpa [#allocation4], 0
    // Predicated region
    $region2: #{tpu_custom_call.1} parent=1 // pred_check
      _
    $region3: #{tpu_custom_call.1} parent=1 // pred_check_branch
      %11 = sbr.rel (0) target = $region5
    $region4: #{tpu_custom_call.1} parent=1 // pred_region
      %13 = vsyncadd [#allocation3], 0
      %s15 = sshll.u32 %s0, 4
      %s16 = int_to_ptr.hbm [resolvable:$true] %s15
      %s17 = sshll.u32 [#allocation2], 4
      %s18 = int_to_ptr.vmem [resolvable:$true] %s17
      %20 = dma.hbm_to_vmem [thread:$0]  %s16, 128, %s18, [#allocation3]
    $region5: #{tpu_custom_call.1} parent=1 // pred_fallthru
      _
    // Predicated region
    $region6: #{tpu_custom_call.1} parent=1 // pred_check
      _
    $region7: #{tpu_custom_call.1} parent=1 // pred_check_branch
      %22 = sbr.rel (0) target = $region9
    $region8: #{tpu_custom_call.1} parent=1 // pred_region
      %24 = vsyncadd [#allocation6], 0
      %s25 = sshll.u32 %s1, 4
      %s26 = int_to_ptr.hbm [resolvable:$true] %s25
      %s27 = sshll.u32 [#allocation5], 4
      %s28 = int_to_ptr.vmem [resolvable:$true] %s27
      %33 = dma.hbm_to_vmem [thread:$0]  %s26, 4864, %s28, [#allocation6], 128, 128, 8
    $region9: #{tpu_custom_call.1} parent=1 // pred_fallthru
      _
    // Predicated region
    $region10: #{tpu_custom_call.1} parent=1 // pred_check
      _
    $region11: #{tpu_custom_call.1} parent=1 // pred_check_branch
      %35 = sbr.rel (0) target = $region13
    $region12: #{tpu_custom_call.1} parent=1 // pred_region
      %37 = dma.done [#allocation3], 128
    $region13: #{tpu_custom_call.1} parent=1 // pred_fallthru
      _
    // Predicated region
    $region14: #{tpu_custom_call.1} parent=1 // pred_check
      _
    $region15: #{tpu_custom_call.1} parent=1 // pred_check_branch
      %39 = sbr.rel (0) target = $region17
    $region16: #{tpu_custom_call.1} parent=1 // pred_region
      %41 = dma.done [#allocation6], 4864
    $region17: #{tpu_custom_call.1} parent=1 // pred_fallthru
      _
    %v42 = vld [vmem:[#allocation2] sm:$0xff]
    %v43 = vld [vmem:[#allocation5] sm:$0x1]
    %v44 = vld [vmem:[#allocation5 + $0x1] sm:$0x1]
    %v45 = vld [vmem:[#allocation5 + $0x2] sm:$0x1]
    %v46 = vld [vmem:[#allocation5 + $0x10] sm:$0xff]
    %v47 = vld [vmem:[#allocation5 + $0x18] sm:$0xff]
    %v48 = vld [vmem:[#allocation5 + $0x20] sm:$0xff]
    %v49 = vld [vmem:[#allocation5 + $0x28] sm:$0xff]
    %v50 = vld [vmem:[#allocation5 + $0x30] sm:$0xff]
    %v51 = vld [vmem:[#allocation5 + $0x38] sm:$0xff]
    %v52 = vld [vmem:[#allocation5 + $0x40] sm:$0xff]
    %v53 = vld [vmem:[#allocation5 + $0x48] sm:$0xff]
    %v54 = vld [vmem:[#allocation5 + $0x50] sm:$0xff]
    %v55 = vld [vmem:[#allocation5 + $0x58] sm:$0xff]
    %v56 = vld [vmem:[#allocation5 + $0x60] sm:$0xff]
    %v57 = vld [vmem:[#allocation5 + $0x68] sm:$0xff]
    %v58 = vld [vmem:[#allocation5 + $0x70] sm:$0xff]
    %v59 = vld [vmem:[#allocation5 + $0x78] sm:$0xff]
    %v60 = vld [vmem:[#allocation5 + $0x80] sm:$0xff]
    %v61 = vld [vmem:[#allocation5 + $0x88] sm:$0xff]
    %v62 = vld [vmem:[#allocation5 + $0x90] sm:$0xff]
    %v63 = vld [vmem:[#allocation5 + $0x98] sm:$0xff]
    %v64 = vld [vmem:[#allocation5 + $0xa0] sm:$0xff]
    %v65 = vld [vmem:[#allocation5 + $0xa8] sm:$0xff]
    %v66 = vld [vmem:[#allocation5 + $0xb0] sm:$0xff]
    %v67 = vld [vmem:[#allocation5 + $0xb8] sm:$0xff]
    %v68 = vld [vmem:[#allocation5 + $0xc0] sm:$0xff]
    %v69 = vld [vmem:[#allocation5 + $0xc8] sm:$0xff]
    %v70 = vld [vmem:[#allocation5 + $0xd0] sm:$0xff]
    %v71 = vld [vmem:[#allocation5 + $0xd8] sm:$0xff]
    %v72 = vld [vmem:[#allocation5 + $0xe0] sm:$0xff]
    %v73 = vld [vmem:[#allocation5 + $0xe8] sm:$0xff]
    %v74 = vld [vmem:[#allocation5 + $0xf0] sm:$0xff]
    %v75 = vld [vmem:[#allocation5 + $0xf8] sm:$0xff]
    %v76 = vld [vmem:[#allocation5 + $0x100] sm:$0xff]
    %v77 = vld [vmem:[#allocation5 + $0x108] sm:$0xff]
    %v78 = vld [vmem:[#allocation5 + $0x110] sm:$0xff]
    %v79 = vld [vmem:[#allocation5 + $0x118] sm:$0xff]
    %v80 = vld [vmem:[#allocation5 + $0x120] sm:$0xff]
    %v81 = vld [vmem:[#allocation5 + $0x128] sm:$0xff]
    %v82 = vperm.slane %v43, 0
    %vm83 = vcmask 261120
    %v85 = vsel %vm83, %v42, 0
    %87 = vmatpush.msra.mxu0 0.0
    %88 = vmatpush.msra.mxu0 0.0
    %89 = vmatpush.msra.mxu0 0.0
    %90 = vmatpush.msra.mxu0 0.0
    %91 = vmatpush.msra.mxu0 0.0
    %92 = vmatpush.msra.mxu0 0.0
    %93 = vmatpush.msra.mxu0 0.0
    %94 = vmatpush.msra.mxu0 0.0
    %95 = vmatpush.msra.mxu0 0.0
    %96 = vmatpush.msra.mxu0 0.0
    %97 = vmatpush.msra.mxu0 0.0
    %98 = vmatpush.msra.mxu0 0.0
    %99 = vmatpush.msra.mxu0 %v49
    %100 = vmatpush.msra.mxu0 %v48
    %101 = vmatpush.msra.mxu0 %v47
    %102 = vmatpush.msra.mxu0 %v46
    %103 = vmatmul.f32.gmra.mxu0 %v85
    %v104 = vpop.f32.mrf.mxu0
    %v105 = vadd.f32 %v82, %v104
    %106 = vdwg.mxu0
    %v107 = vmax.f32 %v105, 0.0
    %v108 = vperm.slane %v44, 0
    %109 = vmatpush.msra.mxu0 %v65
    %110 = vmatpush.msra.mxu0 %v64
    %111 = vmatpush.msra.mxu0 %v63
    %112 = vmatpush.msra.mxu0 %v62
    %113 = vmatpush.msra.mxu0 %v61
    %114 = vmatpush.msra.mxu0 %v60
    %115 = vmatpush.msra.mxu0 %v59
    %116 = vmatpush.msra.mxu0 %v58
    %117 = vmatpush.msra.mxu0 %v57
    %118 = vmatpush.msra.mxu0 %v56
    %119 = vmatpush.msra.mxu0 %v55
    %120 = vmatpush.msra.mxu0 %v54
    %121 = vmatpush.msra.mxu0 %v53
    %122 = vmatpush.msra.mxu0 %v52
    %123 = vmatpush.msra.mxu0 %v51
    %124 = vmatpush.msra.mxu0 %v50
    %125 = vmatmul.f32.gmra.mxu0 %v107
    %v126 = vpop.f32.mrf.mxu0
    %v127 = vadd.f32 %v108, %v126
    %128 = vdwg.mxu0
    %v129 = vmax.f32 %v127, 0.0
    %v130 = vperm.slane %v45, 0
    %131 = vmatpush.msra.mxu0 %v81
    %132 = vmatpush.msra.mxu0 %v80
    %133 = vmatpush.msra.mxu0 %v79
    %134 = vmatpush.msra.mxu0 %v78
    %135 = vmatpush.msra.mxu0 %v77
    %136 = vmatpush.msra.mxu0 %v76
    %137 = vmatpush.msra.mxu0 %v75
    %138 = vmatpush.msra.mxu0 %v74
    %139 = vmatpush.msra.mxu0 %v73
    %140 = vmatpush.msra.mxu0 %v72
    %141 = vmatpush.msra.mxu0 %v71
    %142 = vmatpush.msra.mxu0 %v70
    %143 = vmatpush.msra.mxu0 %v69
    %144 = vmatpush.msra.mxu0 %v68
    %145 = vmatpush.msra.mxu0 %v67
    %146 = vmatpush.msra.mxu0 %v66
    %147 = vmatmul.f32.gmra.mxu0 %v129
    %v148 = vpop.f32.mrf.mxu0
    %v149 = vadd.f32 %v130, %v148
    %150 = vdwg.mxu0
    %151 = vst [vmem:[#allocation7] sm:$0xff] %v149
    // Predicated region
    $region18: #{tpu_custom_call.1} parent=1 // pred_check
      _
    $region19: #{tpu_custom_call.1} parent=1 // pred_check_branch
      %153 = sbr.rel (0) target = $region21
    $region20: #{tpu_custom_call.1} parent=1 // pred_region
      %155 = vsyncadd [#allocation4], 0
      %s157 = sshll.u32 [#allocation7], 4
      %s158 = int_to_ptr.vmem [resolvable:$true] %s157
      %s159 = sshll.u32 %s2, 4
      %s160 = int_to_ptr.hbm [resolvable:$true] %s159
      %162 = dma.vmem_to_hbm [thread:$0]  %s158, 128, %s160, [#allocation4]
    $region21: #{tpu_custom_call.1} parent=1 // pred_fallthru
      _
    // Predicated region
    $region22: #{tpu_custom_call.1} parent=1 // pred_check
      _
    $region23: #{tpu_custom_call.1} parent=1 // pred_check_branch
      %164 = sbr.rel (0) target = $region25
    $region24: #{tpu_custom_call.1} parent=1 // pred_region
      %166 = dma.done [#allocation4], 128
    $region25: #{tpu_custom_call.1} parent=1 // pred_fallthru
      _
    %167 = vsyncpa [#allocation3], 1
    %168 = vsyncpa [#allocation6], 1
    %169 = vsyncpa [#allocation4], 1

</llo_original>
